<compile_context>
chip_gen: v5e
topology: v5e:2x2
jax: 0.10.0
libtpu: 0.0.40
codegen_flags: <defaults>
</compile_context>

<pallas_src>
import jax
import jax.numpy as jnp
from jax import lax
from jax.experimental import pallas as pl
from jax.experimental.pallas import tpu as pltpu


def multihead_backbone_forward(x, conv_w, conv_b, head_w, head_b, *, tile_b=None):
    """x: (B, C, H, W) NCHW float32.  Returns (B, n_heads*classes) float32."""
    B, C, H, W = x.shape
    F, _, KH, KW = conv_w.shape
    n_out = head_w.shape[0]

    pad = (KH - 1) // 2                       # SAME padding for 3x3 / stride 1
    HW = H * W                                # valid output positions per image
    KC = KH * KW * C                          # packed contraction depth (36)
    n_out_pad = ((n_out + 127) // 128) * 128  # lane-dense output stores

    # Batch tile: amortize the ~0.35us per-grid-step overhead while keeping the
    # parallel grid length >= 2 so both v7x TensorCores get work.  (On v6e the
    # 128 MiB VMEM comfortably allows a larger tile_b if B grows.)
    if tile_b is None:
        tile_b = max(1, min(8, B // 2)) if B >= 2 else 1
    num_blocks = -(-B // tile_b)
    B_pad = num_blocks * tile_b

    # ---------------- wrapper-side layout plumbing (cheap) ----------------
    # im2col-lite: x_taps[b, p, (kh*KW+kw)*C + c] = xpad[b, c, y+kh, x+kw]
    # with p = y*W + x.  Only valid output positions are packed, so no mask
    # for padding junk is needed and pooling is a uniform 1/(H*W) average.
    xpad = jnp.pad(x, ((0, 0), (0, 0), (pad, pad), (pad, pad)))
    taps = [xpad[:, :, kh:kh + H, kw:kw + W]
            for kh in range(KH) for kw in range(KW)]       # each (B, C, H, W)
    x_taps = jnp.stack(taps, axis=0)                        # (KH*KW, B, C, H, W)
    x_taps = x_taps.transpose(1, 3, 4, 0, 2).reshape(B, HW, KC)
    if B_pad != B:
        x_taps = jnp.pad(x_taps, ((0, B_pad - B), (0, 0), (0, 0)))
    x_taps = x_taps.reshape(B_pad * HW, KC).astype(jnp.bfloat16)

    # conv weight packed to match: w_packed[(kh*KW+kw)*C + c, f] = conv_w[f,c,kh,kw]
    w_packed = conv_w.transpose(2, 3, 1, 0).reshape(KC, F).astype(jnp.bfloat16)
    cb = conv_b.reshape(1, F).astype(jnp.float32)

    # Block-diagonal pooling matrix: pool_mat[b', b'*HW:(b'+1)*HW] = 1/(H*W).
    # Lane-dense (TB, TB*HW) so the pool is a single MXU matmul per step.
    pool_mat = jnp.repeat(jnp.eye(tile_b, dtype=jnp.float32), HW, axis=1) / float(HW)

    hw = jnp.pad(head_w.T, ((0, 0), (0, n_out_pad - n_out))).astype(jnp.bfloat16)
    hb = jnp.pad(head_b, (0, n_out_pad - n_out)).reshape(1, n_out_pad).astype(jnp.float32)

    # ------------------------------ kernel --------------------------------
    def kernel(x_ref, w_ref, cb_ref, pool_ref, hw_ref, hb_ref, out_ref):
        # Fused 3x3 conv: one (TB*HW, 9C) x (9C, F) matmul, f32 accumulation.
        feat = jnp.dot(x_ref[...], w_ref[...],
                       preferred_element_type=jnp.float32)          # (TB*HW, F)
        feat = jnp.maximum(feat + cb_ref[...], 0.0)                  # bias + ReLU

        # Global average pool per batch element as an MXU matmul.
        pooled = jnp.dot(pool_ref[...], feat,
                         preferred_element_type=jnp.float32)         # (TB, F)

        # Multi-head linear (128-lane padded output, un-masked stores).
        out = jnp.dot(pooled.astype(hw_ref.dtype), hw_ref[...],
                      preferred_element_type=jnp.float32) + hb_ref[...]
        out_ref[0] = out.astype(out_ref.dtype)                       # (TB, n_out_pad)

    flops = num_blocks * (2 * tile_b * HW * KC * F          # conv matmul
                          + 2 * tile_b * HW * F             # bias + relu
                          + 2 * tile_b * tile_b * HW * F    # pool matmul
                          + 2 * tile_b * F * n_out_pad      # heads matmul
                          + tile_b * n_out_pad)             # heads bias
    bytes_accessed = (x_taps.size * 2 + w_packed.size * 2 + hw.size * 2
                      + cb.size * 4 + hb.size * 4 + pool_mat.size * 4
                      + B_pad * n_out_pad * 4)

    out = pl.pallas_call(
        kernel,
        out_shape=jax.ShapeDtypeStruct((num_blocks, tile_b, n_out_pad), jnp.float32),
        grid=(num_blocks,),
        in_specs=[
            pl.BlockSpec((tile_b * HW, KC), lambda b: (b, 0)),
            pl.BlockSpec((KC, F), lambda b: (0, 0)),
            pl.BlockSpec((1, F), lambda b: (0, 0)),
            pl.BlockSpec((tile_b, tile_b * HW), lambda b: (0, 0)),
            pl.BlockSpec((F, n_out_pad), lambda b: (0, 0)),
            pl.BlockSpec((1, n_out_pad), lambda b: (0, 0)),
        ],
        out_specs=pl.BlockSpec((1, tile_b, n_out_pad), lambda b: (b, 0, 0)),
        compiler_params=pltpu.CompilerParams(
            dimension_semantics=("parallel",)),
        cost_estimate=pl.CostEstimate(flops=flops, transcendentals=0,
                                      bytes_accessed=bytes_accessed),
    )(x_taps, w_packed, cb, pool_mat, hw, hb)

    return out.reshape(B_pad, n_out_pad)[:B, :n_out]


def _reference_forward(x, conv_w, conv_b, head_w, head_b):
    """Plain-JAX f32 reference matching the PyTorch semantics."""
    feat = lax.conv_general_dilated(
        x, conv_w, window_strides=(1, 1), padding=((1, 1), (1, 1)),
        dimension_numbers=("NCHW", "OIHW", "NCHW"))
    feat = jnp.maximum(feat + conv_b[None, :, None, None], 0.0)
    pooled = feat.mean(axis=(2, 3))                 # (B, F)  -> .view(bs, -1)
    return pooled @ head_w.T + head_b               # nn.Linear


if __name__ == "__main__":
    # Small shapes consistent with the module
    B, C, H, W = 2, 4, 16, 16
    feature_dim = 32
    n_heads, classes = 3, 10
    n_out = n_heads * classes

    key = jax.random.PRNGKey(0)
    kx, k1, k2, k3, k4 = jax.random.split(key, 5)
    x = jax.random.normal(kx, (B, C, H, W), dtype=jnp.float32)

    conv_w = 0.1 * jax.random.normal(k1, (feature_dim, C, 3, 3), dtype=jnp.float32)
    conv_b = 0.1 * jax.random.normal(k2, (feature_dim,), dtype=jnp.float32)
    head_w = 0.1 * jax.random.normal(k3, (n_out, feature_dim), dtype=jnp.float32)
    head_b = 0.1 * jax.random.normal(k4, (n_out,), dtype=jnp.float32)

    out = jax.jit(multihead_backbone_forward)(x, conv_w, conv_b, head_w, head_b)
    out = jax.block_until_ready(out)

    ref = _reference_forward(x, conv_w, conv_b, head_w, head_b)
    assert out.shape == (B, n_out), out.shape
    err = float(jnp.max(jnp.abs(out - ref)))
    # bf16 inputs / f32 accumulation: relaxed tolerance vs the f32 reference.
    assert jnp.allclose(out, ref, atol=2e-2, rtol=2e-2), f"max err {err}"

    print("KERNEL_OK")
</pallas_src>

<mosaic_0001>
module attributes {stable_mosaic.version = 11 : i64} {
  func.func @kernel(%arg0: i32, %arg1: memref<256x36xbf16, #tpu.memory_space<vmem>>, %arg2: memref<36x32xbf16, #tpu.memory_space<vmem>>, %arg3: memref<1x32xf32, #tpu.memory_space<vmem>>, %arg4: memref<1x256xf32, #tpu.memory_space<vmem>>, %arg5: memref<32x128xbf16, #tpu.memory_space<vmem>>, %arg6: memref<1x128xf32, #tpu.memory_space<vmem>>, %arg7: memref<1x1x128xf32, #tpu.memory_space<vmem>>) attributes {dimension_semantics = [#tpu.dimension_semantics<parallel>], iteration_bounds = array<i64: 2>, scalar_prefetch = 0 : i64, scratch_operands = 0 : i64, tpu.core_type = #tpu.core_type<tc>, window_params = [{transform_indices = @transform_0, window_bounds = array<i64: 256, 36>}, {pipeline_mode = #tpu.pipeline_mode<synchronous>, transform_indices = @transform_1, window_bounds = array<i64: 36, 32>}, {pipeline_mode = #tpu.pipeline_mode<synchronous>, transform_indices = @transform_2, window_bounds = array<i64: 1, 32>}, {pipeline_mode = #tpu.pipeline_mode<synchronous>, transform_indices = @transform_3, window_bounds = array<i64: 1, 256>}, {pipeline_mode = #tpu.pipeline_mode<synchronous>, transform_indices = @transform_4, window_bounds = array<i64: 32, 128>}, {pipeline_mode = #tpu.pipeline_mode<synchronous>, transform_indices = @transform_5, window_bounds = array<i64: 1, 128>}, {transform_indices = @transform_6, window_bounds = array<i64: 1, 1, 128>}]} {
    %c0 = arith.constant 0 : index
    %c0_0 = arith.constant 0 : index
    %0 = vector.load %arg1[%c0, %c0_0] : memref<256x36xbf16, #tpu.memory_space<vmem>>, vector<256x36xbf16>
    %c0_1 = arith.constant 0 : index
    %c0_2 = arith.constant 0 : index
    %1 = vector.load %arg2[%c0_1, %c0_2] : memref<36x32xbf16, #tpu.memory_space<vmem>>, vector<36x32xbf16>
    %cst = arith.constant dense<0.000000e+00> : vector<256x32xf32>
    %2 = tpu.matmul %0, %1, %cst {dimension_numbers = #tpu.dot_dimension_numbers<[1], [0], [0], [1], [0, 0, 1, 1], [], []>} : vector<256x36xbf16>, vector<36x32xbf16>, vector<256x32xf32> -> vector<256x32xf32>
    %c0_3 = arith.constant 0 : index
    %c0_4 = arith.constant 0 : index
    %3 = vector.load %arg3[%c0_3, %c0_4] : memref<1x32xf32, #tpu.memory_space<vmem>>, vector<1x32xf32>
    %4 = vector.broadcast %3 : vector<1x32xf32> to vector<256x32xf32>
    %5 = arith.addf %2, %4 : vector<256x32xf32>
    %cst_5 = arith.constant 0.000000e+00 : f32
    %6 = vector.broadcast %cst_5 : f32 to vector<256x32xf32>
    %7 = arith.maximumf %5, %6 : vector<256x32xf32>
    %c0_6 = arith.constant 0 : index
    %c0_7 = arith.constant 0 : index
    %8 = vector.load %arg4[%c0_6, %c0_7] : memref<1x256xf32, #tpu.memory_space<vmem>>, vector<1x256xf32>
    %cst_8 = arith.constant dense<0.000000e+00> : vector<1x32xf32>
    %9 = tpu.matmul %8, %7, %cst_8 {dimension_numbers = #tpu.dot_dimension_numbers<[1], [0], [0], [1], [0, 0, 1, 1], [], []>} : vector<1x256xf32>, vector<256x32xf32>, vector<1x32xf32> -> vector<1x32xf32>
    %10 = arith.truncf %9 : vector<1x32xf32> to vector<1x32xbf16>
    %c0_9 = arith.constant 0 : index
    %c0_10 = arith.constant 0 : index
    %11 = vector.load %arg5[%c0_9, %c0_10] : memref<32x128xbf16, #tpu.memory_space<vmem>>, vector<32x128xbf16>
    %cst_11 = arith.constant dense<0.000000e+00> : vector<1x128xf32>
    %12 = tpu.matmul %10, %11, %cst_11 {dimension_numbers = #tpu.dot_dimension_numbers<[1], [0], [0], [1], [0, 0, 1, 1], [], []>} : vector<1x32xbf16>, vector<32x128xbf16>, vector<1x128xf32> -> vector<1x128xf32>
    %c0_12 = arith.constant 0 : index
    %c0_13 = arith.constant 0 : index
    %13 = vector.load %arg6[%c0_12, %c0_13] : memref<1x128xf32, #tpu.memory_space<vmem>>, vector<1x128xf32>
    %14 = arith.addf %12, %13 : vector<1x128xf32>
    %c0_14 = arith.constant 0 : index
    %c0_15 = arith.constant 0 : index
    %c0_16 = arith.constant 0 : index
    %15 = vector.load %arg7[%c0_14, %c0_15, %c0_16] : memref<1x1x128xf32, #tpu.memory_space<vmem>>, vector<1x1x128xf32>
    %16 = vector.shape_cast %15 : vector<1x1x128xf32> to vector<1x128xf32>
    %17 = vector.shape_cast %14 : vector<1x128xf32> to vector<1x1x128xf32>
    tpu.vector_store %arg7[%c0_14, %c0_15, %c0_16], %17 {strides = array<i32>} : memref<1x1x128xf32, #tpu.memory_space<vmem>>, vector<1x1x128xf32>,
    return
  }
  func.func @transform_0(%arg0: i32) -> (i32, i32) {
    %c0_i32 = arith.constant 0 : i32
    %c0_i32_0 = arith.constant 0 : i32
    return %arg0, %c0_i32 : i32, i32
  }
  func.func @transform_1(%arg0: i32) -> (i32, i32) {
    %c0_i32 = arith.constant 0 : i32
    %c0_i32_0 = arith.constant 0 : i32
    %c0_i32_1 = arith.constant 0 : i32
    return %c0_i32, %c0_i32_0 : i32, i32
  }
  func.func @transform_2(%arg0: i32) -> (i32, i32) {
    %c0_i32 = arith.constant 0 : i32
    %c0_i32_0 = arith.constant 0 : i32
    %c0_i32_1 = arith.constant 0 : i32
    return %c0_i32, %c0_i32_0 : i32, i32
  }
  func.func @transform_3(%arg0: i32) -> (i32, i32) {
    %c0_i32 = arith.constant 0 : i32
    %c0_i32_0 = arith.constant 0 : i32
    %c0_i32_1 = arith.constant 0 : i32
    return %c0_i32, %c0_i32_0 : i32, i32
  }
  func.func @transform_4(%arg0: i32) -> (i32, i32) {
    %c0_i32 = arith.constant 0 : i32
    %c0_i32_0 = arith.constant 0 : i32
    %c0_i32_1 = arith.constant 0 : i32
    return %c0_i32, %c0_i32_0 : i32, i32
  }
  func.func @transform_5(%arg0: i32) -> (i32, i32) {
    %c0_i32 = arith.constant 0 : i32
    %c0_i32_0 = arith.constant 0 : i32
    %c0_i32_1 = arith.constant 0 : i32
    return %c0_i32, %c0_i32_0 : i32, i32
  }
  func.func @transform_6(%arg0: i32) -> (i32, i32, i32) {
    %c0_i32 = arith.constant 0 : i32
    %c0_i32_0 = arith.constant 0 : i32
    %c0_i32_1 = arith.constant 0 : i32
    return %arg0, %c0_i32, %c0_i32_0 : i32, i32, i32
  }
}

</mosaic_0001>

<llo_original>
// kernel: div.1
$region0: #{div.1}
  #allocation0 [shape = 's32[1]{0}', space=sflag, size = 0x4, scoped, tag = 'scoped memory for div.1']
  %s0 = inlined_call_operand.<no memory space> [shape: f32[], index: 0, kind: input, shape index: {}]
  %s1 = inlined_call_operand.vmem [shape: f32[1,256], index: 1, kind: output, shape index: {}]
  %v2 = vstv %s0
  %3 = vst [vmem:[%s1] sm:$0x1] %v2
  %s4 = scalar_lea.vmem %s1, 1
  %5 = vst [vmem:[%s4] sm:$0x1] %v2

// kernel: multihead_backbone_forward.1
$region0: #{multihead_backbone_forward.1}
  #allocation0 [shape = 'u32[]', space=smem, size = 0x4, offset = 0x4, fixed_abs, tag = 'smem constant byte address 0x4 - core index']
  #allocation1 [shape = 'u32[72,128]{1,0:T(1,128)}', space=vmem, size = 0x9000, scoped, tag = 'internal scratch']
  %s0 = inlined_call_operand.vmem [shape: bf16[512,36], index: 0, kind: input, shape index: {}]
  %s1 = inlined_call_operand.vmem [shape: bf16[36,32], index: 1, kind: input, shape index: {}]
  %s2 = inlined_call_operand.vmem [shape: f32[1,32], index: 2, kind: input, shape index: {}]
  %s3 = inlined_call_operand.vmem [shape: f32[1,256], index: 3, kind: input, shape index: {}]
  %s4 = inlined_call_operand.vmem [shape: bf16[32,128], index: 4, kind: input, shape index: {}]
  %s5 = inlined_call_operand.vmem [shape: f32[1,128], index: 5, kind: input, shape index: {}]
  %s6 = inlined_call_operand.hbm [shape: f32[2,1,128], index: 6, kind: output, shape index: {}]
  %s7 = sld [smem:[#allocation0]]
  $region57: #{multihead_backbone_forward.1} parent=0
    _
  %s9 = ssub.s32 1, %s7
  %s10 = scalar_select 0, %s9, %s7
  $region1: #{multihead_backbone_forward.1} parent=0
    #allocation2 [shape = 'u8[1024]{0}', space=vmem, size = 0x400, scoped, tag = 'output window, operand 0']
    #allocation3 [shape = 's32[2]{0}', space=sflag, size = 0x8, scoped, tag = 'scoped memory for multihead_backbone_forward.1']
    %11 = vsyncpa [#allocation3], 0
    %s12 = scalar_lea.sflag [#allocation3], 1
    %13 = vsyncpa %s12, 0
    loop: start=0, step=1, limit=4
    $region2: #{multihead_backbone_forward.1} parent=1 // loop_pre_header
      _
    $region3: #{multihead_backbone_forward.1} parent=1 // loop_header
      %s15 = sphi 0, %s19
      %p16 = scmp.ge.s32.totalorder %s15, 4
      %s25 = sphi 0, %s27
      %s28 = sphi 0, %s25
      %s29 = sphi 0, %s28
      %s45 = sphi 0, %s29
      %s49 = sphi 0, %s49
      %s51 = sphi 0, %s49
      %s52 = sphi 0, %s51
      %s66 = sphi 0, %s52
      %s70 = sphi 0, %s70
      %s72 = sphi 0, %s70
      %s73 = sphi 0, %s72
      %s87 = sphi 0, %s73
      %s91 = sphi 0, %s91
      %s93 = sphi 0, %s91
      %s94 = sphi 0, %s93
      %s108 = sphi 0, %s94
      %s112 = sphi 0, %s112
      %s114 = sphi 0, %s112
      %s115 = sphi 0, %s114
      %s129 = sphi 0, %s115
      %s133 = sphi 0, %s133
      %s135 = sphi 0, %s133
      %s136 = sphi 0, %s135
      %s150 = sphi 0, %s136
      %s156 = sphi 0, %s158
      %s159 = sphi 0, %s156
      %s160 = sphi 0, %s159
      %s176 = sphi 0, %s160
    $region4: #{multihead_backbone_forward.1} parent=1 // loop_header_branch
      %18 = sbr.rel (%p16) target = $region8
    $region5: #{multihead_backbone_forward.1} parent=1 // loop_body
      %s20 = ssub.s32 %s15, 1
      %s21 = ssub.s32 %s15, 2
      %s22 = sadd.s32 %s15, 1
      %s23 = ssub.s32 %s15, %s22
      %p24 = scmp.eq.s32.totalorder %s23, 0
      %s26 = sadd.s32 %s25, 1
      %s27 = scalar_select %p24, %s25, %s26
      %p30 = pneg %p24
      %p31 = scmp.eq.s32.totalorder %s15, 1
      %p32 = por %p30, %p31
      %p33 = scmp.ne.s32.totalorder %s25, %s28
      %p34 = scmp.eq.s32.totalorder %s15, 0
      %p35 = por %p33, %p34
      %p36 = scmp.ne.s32.totalorder %s25, %s28
      %p37 = scmp.eq.s32.totalorder %s20, 1
      %p38 = por %p36, %p37
      %p39 = scmp.ne.s32.totalorder %s28, %s29
      %p40 = scmp.eq.s32.totalorder %s20, 0
      %p41 = por %p39, %p40
      %p42 = scmp.ne.s32.totalorder %s28, %s29
      %p43 = scmp.eq.s32.totalorder %s21, 1
      %p44 = por %p42, %p43
      %p46 = scmp.ne.s32.totalorder %s29, %s45
      %p47 = scmp.eq.s32.totalorder %s21, 0
      %p48 = por %p46, %p47
      %s50 = sadd.s32 %s49, 1
      %p53 = scmp.eq.s32.totalorder %s15, 1
      %p54 = scmp.ne.s32.totalorder %s49, %s51
      %p55 = scmp.eq.s32.totalorder %s15, 0
      %p56 = por %p54, %p55
      %p57 = scmp.ne.s32.totalorder %s49, %s51
      %p58 = scmp.eq.s32.totalorder %s20, 1
      %p59 = por %p57, %p58
      %p60 = scmp.ne.s32.totalorder %s51, %s52
      %p61 = scmp.eq.s32.totalorder %s20, 0
      %p62 = por %p60, %p61
      %p63 = scmp.ne.s32.totalorder %s51, %s52
      %p64 = scmp.eq.s32.totalorder %s21, 1
      %p65 = por %p63, %p64
      %p67 = scmp.ne.s32.totalorder %s52, %s66
      %p68 = scmp.eq.s32.totalorder %s21, 0
      %p69 = por %p67, %p68
      %s71 = sadd.s32 %s70, 1
      %p74 = scmp.eq.s32.totalorder %s15, 1
      %p75 = scmp.ne.s32.totalorder %s70, %s72
      %p76 = scmp.eq.s32.totalorder %s15, 0
      %p77 = por %p75, %p76
      %p78 = scmp.ne.s32.totalorder %s70, %s72
      %p79 = scmp.eq.s32.totalorder %s20, 1
      %p80 = por %p78, %p79
      %p81 = scmp.ne.s32.totalorder %s72, %s73
      %p82 = scmp.eq.s32.totalorder %s20, 0
      %p83 = por %p81, %p82
      %p84 = scmp.ne.s32.totalorder %s72, %s73
      %p85 = scmp.eq.s32.totalorder %s21, 1
      %p86 = por %p84, %p85
      %p88 = scmp.ne.s32.totalorder %s73, %s87
      %p89 = scmp.eq.s32.totalorder %s21, 0
      %p90 = por %p88, %p89
      %s92 = sadd.s32 %s91, 1
      %p95 = scmp.eq.s32.totalorder %s15, 1
      %p96 = scmp.ne.s32.totalorder %s91, %s93
      %p97 = scmp.eq.s32.totalorder %s15, 0
      %p98 = por %p96, %p97
      %p99 = scmp.ne.s32.totalorder %s91, %s93
      %p100 = scmp.eq.s32.totalorder %s20, 1
      %p101 = por %p99, %p100
      %p102 = scmp.ne.s32.totalorder %s93, %s94
      %p103 = scmp.eq.s32.totalorder %s20, 0
      %p104 = por %p102, %p103
      %p105 = scmp.ne.s32.totalorder %s93, %s94
      %p106 = scmp.eq.s32.totalorder %s21, 1
      %p107 = por %p105, %p106
      %p109 = scmp.ne.s32.totalorder %s94, %s108
      %p110 = scmp.eq.s32.totalorder %s21, 0
      %p111 = por %p109, %p110
      %s113 = sadd.s32 %s112, 1
      %p116 = scmp.eq.s32.totalorder %s15, 1
      %p117 = scmp.ne.s32.totalorder %s112, %s114
      %p118 = scmp.eq.s32.totalorder %s15, 0
      %p119 = por %p117, %p118
      %p120 = scmp.ne.s32.totalorder %s112, %s114
      %p121 = scmp.eq.s32.totalorder %s20, 1
      %p122 = por %p120, %p121
      %p123 = scmp.ne.s32.totalorder %s114, %s115
      %p124 = scmp.eq.s32.totalorder %s20, 0
      %p125 = por %p123, %p124
      %p126 = scmp.ne.s32.totalorder %s114, %s115
      %p127 = scmp.eq.s32.totalorder %s21, 1
      %p128 = por %p126, %p127
      %p130 = scmp.ne.s32.totalorder %s115, %s129
      %p131 = scmp.eq.s32.totalorder %s21, 0
      %p132 = por %p130, %p131
      %s134 = sadd.s32 %s133, 1
      %p137 = scmp.eq.s32.totalorder %s15, 1
      %p138 = scmp.ne.s32.totalorder %s133, %s135
      %p139 = scmp.eq.s32.totalorder %s15, 0
      %p140 = por %p138, %p139
      %p141 = scmp.ne.s32.totalorder %s133, %s135
      %p142 = scmp.eq.s32.totalorder %s20, 1
      %p143 = por %p141, %p142
      %p144 = scmp.ne.s32.totalorder %s135, %s136
      %p145 = scmp.eq.s32.totalorder %s20, 0
      %p146 = por %p144, %p145
      %p147 = scmp.ne.s32.totalorder %s135, %s136
      %p148 = scmp.eq.s32.totalorder %s21, 1
      %p149 = por %p147, %p148
      %p151 = scmp.ne.s32.totalorder %s136, %s150
      %p152 = scmp.eq.s32.totalorder %s21, 0
      %p153 = por %p151, %p152
      %s154 = ssub.s32 %s15, %s22
      %p155 = scmp.eq.s32.totalorder %s154, 0
      %s157 = sadd.s32 %s156, 1
      %s158 = scalar_select %p155, %s156, %s157
      %p161 = pneg %p155
      %p162 = scmp.eq.s32.totalorder %s15, 1
      %p163 = por %p161, %p162
      %p164 = scmp.ne.s32.totalorder %s156, %s159
      %p165 = scmp.eq.s32.totalorder %s15, 0
      %p166 = por %p164, %p165
      %p167 = scmp.ne.s32.totalorder %s156, %s159
      %p168 = scmp.eq.s32.totalorder %s20, 1
      %p169 = por %p167, %p168
      %p170 = scmp.ne.s32.totalorder %s159, %s160
      %p171 = scmp.eq.s32.totalorder %s20, 0
      %p172 = por %p170, %p171
      %p173 = scmp.ne.s32.totalorder %s159, %s160
      %p174 = scmp.eq.s32.totalorder %s21, 1
      %p175 = por %p173, %p174
      %p177 = scmp.ne.s32.totalorder %s160, %s176
      %p178 = scmp.eq.s32.totalorder %s21, 0
      %p179 = por %p177, %p178
      %p180 = scmp.le.s32.totalorder 1, %s15
      %p181 = scmp.lt.s32.totalorder %s15, 3
      %p182 = pnand %p180, %p181
      %p183 = pneg %p182
      // Predicated region
      $region9: #{multihead_backbone_forward.1} parent=5 // pred_check
        _
      $region10: #{multihead_backbone_forward.1} parent=5 // pred_check_branch
        %185 = sbr.rel (%p182) target = $region12
      $region11: #{multihead_backbone_forward.1} parent=5 // pred_region
        %s186 = ssub.s32 %s15, 1
        // Predicated region
        $region13: #{multihead_backbone_forward.1} parent=11 // pred_check
          %p187 = pneg %p62
        $region14: #{multihead_backbone_forward.1} parent=11 // pred_check_branch
          %189 = sbr.rel (%p187) target = $region16
        $region15: #{multihead_backbone_forward.1} parent=11 // pred_region
          _
        $region16: #{multihead_backbone_forward.1} parent=11 // pred_fallthru
          _
        // Predicated region
        $region17: #{multihead_backbone_forward.1} parent=11 // pred_check
          %p190 = pneg %p83
        $region18: #{multihead_backbone_forward.1} parent=11 // pred_check_branch
          %192 = sbr.rel (%p190) target = $region20
        $region19: #{multihead_backbone_forward.1} parent=11 // pred_region
          _
        $region20: #{multihead_backbone_forward.1} parent=11 // pred_fallthru
          _
        // Predicated region
        $region21: #{multihead_backbone_forward.1} parent=11 // pred_check
          %p193 = pneg %p104
        $region22: #{multihead_backbone_forward.1} parent=11 // pred_check_branch
          %195 = sbr.rel (%p193) target = $region24
        $region23: #{multihead_backbone_forward.1} parent=11 // pred_region
          _
        $region24: #{multihead_backbone_forward.1} parent=11 // pred_fallthru
          _
        // Predicated region
        $region25: #{multihead_backbone_forward.1} parent=11 // pred_check
          %p196 = pneg %p125
        $region26: #{multihead_backbone_forward.1} parent=11 // pred_check_branch
          %198 = sbr.rel (%p196) target = $region28
        $region27: #{multihead_backbone_forward.1} parent=11 // pred_region
          _
        $region28: #{multihead_backbone_forward.1} parent=11 // pred_fallthru
          _
        // Predicated region
        $region29: #{multihead_backbone_forward.1} parent=11 // pred_check
          %p199 = pneg %p146
        $region30: #{multihead_backbone_forward.1} parent=11 // pred_check_branch
          %201 = sbr.rel (%p199) target = $region32
        $region31: #{multihead_backbone_forward.1} parent=11 // pred_region
          _
        $region32: #{multihead_backbone_forward.1} parent=11 // pred_fallthru
          _
      $region12: #{multihead_backbone_forward.1} parent=5 // pred_fallthru
        _
      %p202 = scmp.lt.s32.totalorder %s15, 2
      // Predicated region
      $region33: #{multihead_backbone_forward.1} parent=5 // pred_check
        %p203 = pneg %p202
      $region34: #{multihead_backbone_forward.1} parent=5 // pred_check_branch
        %205 = sbr.rel (%p203) target = $region36
      $region35: #{multihead_backbone_forward.1} parent=5 // pred_region
        // Predicated region
        $region37: #{multihead_backbone_forward.1} parent=35 // pred_check
          %p206 = pneg %p35
        $region38: #{multihead_backbone_forward.1} parent=35 // pred_check_branch
          %208 = sbr.rel (%p206) target = $region40
        $region39: #{multihead_backbone_forward.1} parent=35 // pred_region
          %s209 = smul.u32 32, %s15
          %p210 = scmp.lt.s32.totalorder %s209, 63
          %s211 = scalar_select %p210, %s209, 63
          %s212 = smul.addr %s211, 4
          %s213 = scalar_lea.vmem %s0, %s212
          %s214 = smul.u32 32, %s15
        $region40: #{multihead_backbone_forward.1} parent=35 // pred_fallthru
          _
      $region36: #{multihead_backbone_forward.1} parent=5 // pred_fallthru
        _
      %p215 = scmp.le.s32.totalorder 1, %s15
      %p216 = scmp.lt.s32.totalorder %s15, 3
      %p217 = pnand %p215, %p216
      %p218 = pneg %p217
      // Predicated region
      $region41: #{multihead_backbone_forward.1} parent=5 // pred_check
        _
      $region42: #{multihead_backbone_forward.1} parent=5 // pred_check_branch
        %220 = sbr.rel (%p217) target = $region44
      $region43: #{multihead_backbone_forward.1} parent=5 // pred_region
        %s221 = ssub.s32 %s15, 1
        %s222 = smul.u32 32, %s20
        %p223 = scmp.lt.s32.totalorder %s222, 63
        %s224 = scalar_select %p223, %s222, 63
        %s225 = smul.addr %s224, 4
        %s226 = scalar_lea.vmem %s0, %s225
        %p227 = pneg %p41
        %p228 = pneg %p38
        %p229 = pneg %p62
        %p230 = pneg %p59
        %p231 = pneg %p83
        %p232 = pneg %p80
        %p233 = pneg %p104
        %p234 = pneg %p101
        %p235 = pneg %p125
        %p236 = pneg %p122
        %p237 = pneg %p146
        %p238 = pneg %p143
        %p239 = pneg %p172
        %p240 = pneg %p169
        %s241 = sand.u32 %s159, 1
        %s242 = scalar_lea.sflag [#allocation3], %s241
        %s243 = sand.u32 %s159, 1
        %s244 = scalar_lea.vmem [#allocation2], %s243
        %s245 = smul.u32 32, %s20
        %p246 = scmp.lt.s32.totalorder %s245, 63
        %s247 = scalar_select %p246, %s245, 63
        %s248 = smul.addr %s247, 4
        %s249 = scalar_lea.vmem %s0, %s248
        %s250 = smul.u32 32, %s20
        %v252 = vld [vmem:[%s249] sm:$0xf]
        %v253 = vld [vmem:[%s249 + $0x4] sm:$0xf]
        %v254 = vld [vmem:[%s249 + $0x8] sm:$0xf]
        %v255 = vld [vmem:[%s249 + $0xc] sm:$0xf]
        %v256 = vld [vmem:[%s249 + $0x10] sm:$0xf]
        %v257 = vld [vmem:[%s249 + $0x14] sm:$0xf]
        %v258 = vld [vmem:[%s249 + $0x18] sm:$0xf]
        %v259 = vld [vmem:[%s249 + $0x1c] sm:$0xf]
        %v260 = vld [vmem:[%s249 + $0x20] sm:$0xf]
        %v261 = vld [vmem:[%s249 + $0x24] sm:$0xf]
        %v262 = vld [vmem:[%s249 + $0x28] sm:$0xf]
        %v263 = vld [vmem:[%s249 + $0x2c] sm:$0xf]
        %v264 = vld [vmem:[%s249 + $0x30] sm:$0xf]
        %v265 = vld [vmem:[%s249 + $0x34] sm:$0xf]
        %v266 = vld [vmem:[%s249 + $0x38] sm:$0xf]
        %v267 = vld [vmem:[%s249 + $0x3c] sm:$0xf]
        %v268 = vld [vmem:[%s249 + $0x40] sm:$0xf]
        %v269 = vld [vmem:[%s249 + $0x44] sm:$0xf]
        %v270 = vld [vmem:[%s249 + $0x48] sm:$0xf]
        %v271 = vld [vmem:[%s249 + $0x4c] sm:$0xf]
        %v272 = vld [vmem:[%s249 + $0x50] sm:$0xf]
        %v273 = vld [vmem:[%s249 + $0x54] sm:$0xf]
        %v274 = vld [vmem:[%s249 + $0x58] sm:$0xf]
        %v275 = vld [vmem:[%s249 + $0x5c] sm:$0xf]
        %v276 = vld [vmem:[%s249 + $0x60] sm:$0xf]
        %v277 = vld [vmem:[%s249 + $0x64] sm:$0xf]
        %v278 = vld [vmem:[%s249 + $0x68] sm:$0xf]
        %v279 = vld [vmem:[%s249 + $0x6c] sm:$0xf]
        %v280 = vld [vmem:[%s249 + $0x70] sm:$0xf]
        %v281 = vld [vmem:[%s249 + $0x74] sm:$0xf]
        %v282 = vld [vmem:[%s249 + $0x78] sm:$0xf]
        %v283 = vld [vmem:[%s249 + $0x7c] sm:$0xf]
        %v284 = vld [vmem:[%s1] sm:$0xf]
        %v285 = vld [vmem:[%s1 + $0x4] sm:$0xf]
        %v286 = vld [vmem:[%s1 + $0x8] sm:$0xf]
        %v287 = vld [vmem:[%s1 + $0xc] sm:$0xf]
        %v288 = vld [vmem:[%s1 + $0x10] sm:$0x3]
        %v289 = vld [vmem:[%s2] sm:$0x1]
        %v291 = vperm.slane %v289, 0
        %v325 = vunpack.c.l.b16 %v252
        %v326 = vunpack.c.l.b16 %v253
        %v327 = vunpack.c.l.b16 %v254
        %v328 = vunpack.c.l.b16 %v255
        %v329 = vunpack.c.l.b16 %v256
        %v330 = vunpack.c.l.b16 %v257
        %v331 = vunpack.c.l.b16 %v258
        %v332 = vunpack.c.l.b16 %v259
        %v333 = vunpack.c.l.b16 %v260
        %v334 = vunpack.c.l.b16 %v261
        %v335 = vunpack.c.l.b16 %v262
        %v336 = vunpack.c.l.b16 %v263
        %v337 = vunpack.c.l.b16 %v264
        %v338 = vunpack.c.l.b16 %v265
        %v339 = vunpack.c.l.b16 %v266
        %v340 = vunpack.c.l.b16 %v267
        %v341 = vunpack.c.l.b16 %v268
        %v342 = vunpack.c.l.b16 %v269
        %v343 = vunpack.c.l.b16 %v270
        %v344 = vunpack.c.l.b16 %v271
        %v345 = vunpack.c.l.b16 %v272
        %v346 = vunpack.c.l.b16 %v273
        %v347 = vunpack.c.l.b16 %v274
        %v348 = vunpack.c.l.b16 %v275
        %v349 = vunpack.c.l.b16 %v276
        %v350 = vunpack.c.l.b16 %v277
        %v351 = vunpack.c.l.b16 %v278
        %v352 = vunpack.c.l.b16 %v279
        %v353 = vunpack.c.l.b16 %v280
        %v354 = vunpack.c.l.b16 %v281
        %v355 = vunpack.c.l.b16 %v282
        %v356 = vunpack.c.l.b16 %v283
        %v357 = vpack.c.b16 %v326, %v325
        %v358 = vpack.c.b16 %v328, %v327
        %v359 = vpack.c.b16 %v330, %v329
        %v360 = vpack.c.b16 %v332, %v331
        %v361 = vpack.c.b16 %v334, %v333
        %v362 = vpack.c.b16 %v336, %v335
        %v363 = vpack.c.b16 %v338, %v337
        %v364 = vpack.c.b16 %v340, %v339
        %v365 = vpack.c.b16 %v342, %v341
        %v366 = vpack.c.b16 %v344, %v343
        %v367 = vpack.c.b16 %v346, %v345
        %v368 = vpack.c.b16 %v348, %v347
        %v369 = vpack.c.b16 %v350, %v349
        %v370 = vpack.c.b16 %v352, %v351
        %v371 = vpack.c.b16 %v354, %v353
        %v372 = vpack.c.b16 %v356, %v355
        %v378 = vunpack.c.l.b16 %v284
        %v379 = vunpack.c.l.b16 %v285
        %v380 = vunpack.c.l.b16 %v286
        %v381 = vunpack.c.l.b16 %v287
        %v382 = vunpack.c.l.b16 %v288
        %v383 = vpack.c.b16 %v379, %v378
        %v384 = vpack.c.b16 %v381, %v380
        %v385 = vpack.c.b16 %v382, %v382
        %vm388 = vcmask 293888
        %v390 = vsel %vm388, %v357, 0
        %v393 = vsel %vm388, %v358, 0
        %v396 = vsel %vm388, %v359, 0
        %v399 = vsel %vm388, %v360, 0
        %v402 = vsel %vm388, %v361, 0
        %v405 = vsel %vm388, %v362, 0
        %v408 = vsel %vm388, %v363, 0
        %v411 = vsel %vm388, %v364, 0
        %v414 = vsel %vm388, %v365, 0
        %v417 = vsel %vm388, %v366, 0
        %v420 = vsel %vm388, %v367, 0
        %v423 = vsel %vm388, %v368, 0
        %v426 = vsel %vm388, %v369, 0
        %v429 = vsel %vm388, %v370, 0
        %v432 = vsel %vm388, %v371, 0
        %v435 = vsel %vm388, %v372, 0
        %vm437 = vcmask 1041408
        %v439 = vsel %vm437, %v385, 0
        %441 = vmatpush.bf16.msra.mxu0 0
        %442 = vmatpush.bf16.msra.mxu0 0
        %443 = vmatpush.bf16.msra.mxu0 0
        %444 = vmatpush.bf16.msra.mxu0 0
        %445 = vmatpush.bf16.msra.mxu0 0
        %446 = vmatpush.bf16.msra.mxu0 %v439
        %447 = vmatpush.bf16.msra.mxu0 %v384
        %448 = vmatpush.bf16.msra.mxu0 %v383
        %449 = vmatmul.bf16.gmra.mxu0 %v390
        %v450 = vpop.f32.mrf.mxu0
        %v451 = vadd.f32 %v291, %v450
        %v452 = vpop.f32.mrf.mxu0
        %v453 = vadd.f32 %v291, %v452
        %454 = vmatmul.bf16.gmra.mxu0 %v393
        %v455 = vpop.f32.mrf.mxu0
        %v456 = vadd.f32 %v291, %v455
        %v457 = vpop.f32.mrf.mxu0
        %v458 = vadd.f32 %v291, %v457
        %459 = vmatmul.bf16.gmra.mxu0 %v396
        %v460 = vpop.f32.mrf.mxu0
        %v461 = vadd.f32 %v291, %v460
        %v462 = vpop.f32.mrf.mxu0
        %v463 = vadd.f32 %v291, %v462
        %464 = vmatmul.bf16.gmra.mxu0 %v399
        %v465 = vpop.f32.mrf.mxu0
        %v466 = vadd.f32 %v291, %v465
        %v467 = vpop.f32.mrf.mxu0
        %v468 = vadd.f32 %v291, %v467
        %469 = vmatmul.bf16.gmra.mxu0 %v402
        %v470 = vpop.f32.mrf.mxu0
        %v471 = vadd.f32 %v291, %v470
        %v472 = vpop.f32.mrf.mxu0
        %v473 = vadd.f32 %v291, %v472
        %474 = vmatmul.bf16.gmra.mxu0 %v405
        %v475 = vpop.f32.mrf.mxu0
        %v476 = vadd.f32 %v291, %v475
        %v477 = vpop.f32.mrf.mxu0
        %v478 = vadd.f32 %v291, %v477
        %479 = vmatmul.bf16.gmra.mxu0 %v408
        %v480 = vpop.f32.mrf.mxu0
        %v481 = vadd.f32 %v291, %v480
        %v482 = vpop.f32.mrf.mxu0
        %v483 = vadd.f32 %v291, %v482
        %484 = vmatmul.bf16.gmra.mxu0 %v411
        %v485 = vpop.f32.mrf.mxu0
        %v486 = vadd.f32 %v291, %v485
        %v487 = vpop.f32.mrf.mxu0
        %v488 = vadd.f32 %v291, %v487
        %489 = vmatmul.bf16.gmra.mxu0 %v414
        %v490 = vpop.f32.mrf.mxu0
        %v491 = vadd.f32 %v291, %v490
        %v492 = vpop.f32.mrf.mxu0
        %v493 = vadd.f32 %v291, %v492
        %494 = vmatmul.bf16.gmra.mxu0 %v417
        %v495 = vpop.f32.mrf.mxu0
        %v496 = vadd.f32 %v291, %v495
        %v497 = vpop.f32.mrf.mxu0
        %v498 = vadd.f32 %v291, %v497
        %499 = vmatmul.bf16.gmra.mxu0 %v420
        %v500 = vpop.f32.mrf.mxu0
        %v501 = vadd.f32 %v291, %v500
        %v502 = vpop.f32.mrf.mxu0
        %v503 = vadd.f32 %v291, %v502
        %504 = vmatmul.bf16.gmra.mxu0 %v423
        %v505 = vpop.f32.mrf.mxu0
        %v506 = vadd.f32 %v291, %v505
        %v507 = vpop.f32.mrf.mxu0
        %v508 = vadd.f32 %v291, %v507
        %509 = vmatmul.bf16.gmra.mxu0 %v426
        %v510 = vpop.f32.mrf.mxu0
        %v511 = vadd.f32 %v291, %v510
        %v512 = vpop.f32.mrf.mxu0
        %v513 = vadd.f32 %v291, %v512
        %514 = vmatmul.bf16.gmra.mxu0 %v429
        %v515 = vpop.f32.mrf.mxu0
        %v516 = vadd.f32 %v291, %v515
        %v517 = vpop.f32.mrf.mxu0
        %v518 = vadd.f32 %v291, %v517
        %519 = vmatmul.bf16.gmra.mxu0 %v432
        %v520 = vpop.f32.mrf.mxu0
        %v521 = vadd.f32 %v291, %v520
        %v522 = vpop.f32.mrf.mxu0
        %v523 = vadd.f32 %v291, %v522
        %524 = vmatmul.bf16.gmra.mxu0 %v435
        %v525 = vpop.f32.mrf.mxu0
        %v526 = vadd.f32 %v291, %v525
        %v527 = vpop.f32.mrf.mxu0
        %v528 = vadd.f32 %v291, %v527
        %529 = vdwg.mxu0
        %v530 = vmax.f32 %v451, 0.0
        %v531 = vmax.f32 %v453, 0.0
        %v532 = vmax.f32 %v456, 0.0
        %v533 = vmax.f32 %v458, 0.0
        %v534 = vmax.f32 %v461, 0.0
        %v535 = vmax.f32 %v463, 0.0
        %v536 = vmax.f32 %v466, 0.0
        %v537 = vmax.f32 %v468, 0.0
        %v538 = vmax.f32 %v471, 0.0
        %v539 = vmax.f32 %v473, 0.0
        %v540 = vmax.f32 %v476, 0.0
        %v541 = vmax.f32 %v478, 0.0
        %v542 = vmax.f32 %v481, 0.0
        %v543 = vmax.f32 %v483, 0.0
        %v544 = vmax.f32 %v486, 0.0
        %v545 = vmax.f32 %v488, 0.0
        %v546 = vmax.f32 %v491, 0.0
        %v547 = vmax.f32 %v493, 0.0
        %v548 = vmax.f32 %v496, 0.0
        %v549 = vmax.f32 %v498, 0.0
        %v550 = vmax.f32 %v501, 0.0
        %v551 = vmax.f32 %v503, 0.0
        %v552 = vmax.f32 %v506, 0.0
        %v553 = vmax.f32 %v508, 0.0
        %v554 = vmax.f32 %v511, 0.0
        %v555 = vmax.f32 %v513, 0.0
        %v556 = vmax.f32 %v516, 0.0
        %v557 = vmax.f32 %v518, 0.0
        %v558 = vmax.f32 %v521, 0.0
        %v559 = vmax.f32 %v523, 0.0
        %v560 = vmax.f32 %v526, 0.0
        %v561 = vmax.f32 %v528, 0.0
        %v562 = vld [vmem:[%s3] sm:$0x3]
        %v564 = vperm.slane %v562, 0
        %v565 = vperm.slane %v562, 1
        %568 = vmatpush.msra.mxu0 %v545
        %569 = vmatpush.msra.mxu0 %v544
        %570 = vmatpush.msra.mxu0 %v543
        %571 = vmatpush.msra.mxu0 %v542
        %572 = vmatpush.msra.mxu0 %v541
        %573 = vmatpush.msra.mxu0 %v540
        %574 = vmatpush.msra.mxu0 %v539
        %575 = vmatpush.msra.mxu0 %v538
        %576 = vmatpush.msra.mxu0 %v537
        %577 = vmatpush.msra.mxu0 %v536
        %578 = vmatpush.msra.mxu0 %v535
        %579 = vmatpush.msra.mxu0 %v534
        %580 = vmatpush.msra.mxu0 %v533
        %581 = vmatpush.msra.mxu0 %v532
        %582 = vmatpush.msra.mxu0 %v531
        %583 = vmatpush.msra.mxu0 %v530
        %584 = vmatmul.f32.gmra.mxu0 %v564
        %v585 = vpop.f32.mrf.mxu0
        %v586 = vadd.f32 0.0, %v585
        %587 = vdwg.mxu0
        %588 = vmatpush.msra.mxu0 %v561
        %589 = vmatpush.msra.mxu0 %v560
        %590 = vmatpush.msra.mxu0 %v559
        %591 = vmatpush.msra.mxu0 %v558
        %592 = vmatpush.msra.mxu0 %v557
        %593 = vmatpush.msra.mxu0 %v556
        %594 = vmatpush.msra.mxu0 %v555
        %595 = vmatpush.msra.mxu0 %v554
        %596 = vmatpush.msra.mxu0 %v553
        %597 = vmatpush.msra.mxu0 %v552
        %598 = vmatpush.msra.mxu0 %v551
        %599 = vmatpush.msra.mxu0 %v550
        %600 = vmatpush.msra.mxu0 %v549
        %601 = vmatpush.msra.mxu0 %v548
        %602 = vmatpush.msra.mxu0 %v547
        %603 = vmatpush.msra.mxu0 %v546
        %604 = vmatmul.f32.gmra.mxu0 %v565
        %v605 = vpop.f32.mrf.mxu0
        %v606 = vadd.f32 %v586, %v605
        %607 = vdwg.mxu0
        %v608 = vpack.c.bf16 %v606, %v606
        %v609 = vld [vmem:[%s4] sm:$0xf]
        %v610 = vld [vmem:[%s4 + $0x4] sm:$0xf]
        %v611 = vld [vmem:[%s4 + $0x8] sm:$0xf]
        %v612 = vld [vmem:[%s4 + $0xc] sm:$0xf]
        %v613 = vld [vmem:[%s5] sm:$0x1]
        %v618 = vunpack.c.l.b16 %v609
        %v619 = vunpack.c.l.b16 %v610
        %v620 = vunpack.c.l.b16 %v611
        %v621 = vunpack.c.l.b16 %v612
        %v622 = vpack.c.b16 %v619, %v618
        %v623 = vpack.c.b16 %v621, %v620
        %vm626 = vcmask 261120
        %v628 = vsel %vm626, %v608, 0
        %630 = vmatpush.bf16.msra.mxu0 0
        %631 = vmatpush.bf16.msra.mxu0 0
        %632 = vmatpush.bf16.msra.mxu0 0
        %633 = vmatpush.bf16.msra.mxu0 0
        %634 = vmatpush.bf16.msra.mxu0 0
        %635 = vmatpush.bf16.msra.mxu0 0
        %636 = vmatpush.bf16.msra.mxu0 %v623
        %637 = vmatpush.bf16.msra.mxu0 %v622
        %638 = vmatmul.bf16.gmra.mxu0 %v628
        %v639 = vpop.f32.mrf.mxu0
        %v640 = vadd.f32 %v613, %v639
        %v641 = vpop.f32.mrf.mxu0
        %642 = vdwg.mxu0
        %643 = vst [vmem:[%s244] sm:$0x1] %v640
        %s644 = sand.u32 %s159, 1
        %s645 = scalar_lea.sflag [#allocation3], %s644
        %s646 = sand.u32 %s159, 1
        %s647 = scalar_lea.vmem [#allocation2], %s646
        // Predicated region
        $region45: #{multihead_backbone_forward.1} parent=43 // pred_check
          %p648 = pneg %p169
        $region46: #{multihead_backbone_forward.1} parent=43 // pred_check_branch
          %650 = sbr.rel (%p648) target = $region48
        $region47: #{multihead_backbone_forward.1} parent=43 // pred_region
          %652 = vsyncadd %s645, 0
          %s653 = scalar_lea.hbm %s6, %s20
          %s655 = sshll.u32 %s647, 4
          %s656 = int_to_ptr.vmem [resolvable:$true] %s655
          %s657 = sshll.u32 %s653, 4
          %s658 = int_to_ptr.hbm [resolvable:$true] %s657
          %660 = dma.vmem_to_hbm [thread:$0]  %s656, 16, %s658, %s645
        $region48: #{multihead_backbone_forward.1} parent=43 // pred_fallthru
          _
      $region44: #{multihead_backbone_forward.1} parent=5 // pred_fallthru
        _
      %p661 = scmp.le.s32.totalorder 2, %s15
      // Predicated region
      $region49: #{multihead_backbone_forward.1} parent=5 // pred_check
        %p662 = pneg %p661
      $region50: #{multihead_backbone_forward.1} parent=5 // pred_check_branch
        %664 = sbr.rel (%p662) target = $region52
      $region51: #{multihead_backbone_forward.1} parent=5 // pred_region
        %s665 = ssub.s32 %s15, 2
        // Predicated region
        $region53: #{multihead_backbone_forward.1} parent=51 // pred_check
          %p666 = pneg %p175
        $region54: #{multihead_backbone_forward.1} parent=51 // pred_check_branch
          %668 = sbr.rel (%p666) target = $region56
        $region55: #{multihead_backbone_forward.1} parent=51 // pred_region
          %s669 = sand.u32 %s160, 1
          %s670 = scalar_lea.sflag [#allocation3], %s669
          %s671 = sand.u32 %s160, 1
          %s672 = scalar_lea.vmem [#allocation2], %s671
          %674 = dma.done %s670, 16
        $region56: #{multihead_backbone_forward.1} parent=51 // pred_fallthru
          _
      $region52: #{multihead_backbone_forward.1} parent=5 // pred_fallthru
        _
    $region6: #{multihead_backbone_forward.1} parent=1 // loop_footer
      %s19 = sadd.s32 1, %s15
    $region7: #{multihead_backbone_forward.1} parent=1 // loop_footer_branch
      %14 = sbr.rel target = $region3
    $region8: #{multihead_backbone_forward.1} parent=1 // loop_exit
      _
    %675 = vsyncpa [#allocation3], 1
    %s676 = scalar_lea.sflag [#allocation3], 1
    %677 = vsyncpa %s676, 1

</llo_original>
